<compile_context>
chip_gen: v5e
topology: v5e:2x2
jax: 0.10.0
libtpu: 0.0.40
codegen_flags: <defaults>
</compile_context>

<pallas_src>
import math

import jax
import jax.numpy as jnp
from jax.experimental import pallas as pl
from jax.experimental.pallas import tpu as pltpu


# ---------------------------------------------------------------------------
# Kernel: streaming add of a (1, TC) PE row onto a (TB, TC) tile of x.
# ---------------------------------------------------------------------------
def _pe_add_kernel(x_ref, pe_ref, o_ref):
    # pe_ref is (1, TC): broadcasts across the batch-row axis of the tile.
    # pe is pre-cast to x.dtype in the wrapper, so this is a plain VPU add.
    o_ref[...] = x_ref[...] + pe_ref[...]


# ---------------------------------------------------------------------------
# PE table construction (mirrors the PyTorch buffer): done once, in the wrapper.
# ---------------------------------------------------------------------------
def build_pe_table(max_len, d_model):
    assert d_model % 2 == 0, "d_model must be even (matches the PyTorch buffer)"
    position = jnp.arange(max_len, dtype=jnp.float32)[:, None]          # (L, 1)
    div_term = jnp.exp(jnp.arange(0, d_model, 2, dtype=jnp.float32)
                       * -(math.log(10000.0) / d_model))                # (D/2,)
    ang = position * div_term                                           # (L, D/2)
    # interleave: even cols = sin, odd cols = cos  (pe[:,0::2]=sin, pe[:,1::2]=cos)
    pe = jnp.stack([jnp.sin(ang), jnp.cos(ang)], axis=-1).reshape(max_len, d_model)
    return pe                                                           # (L, D) f32


def _pick_block(dim, pref, align):
    """Largest block that divides `dim`, is a multiple of `align`, and <= pref.
    Falls back to the full dim (always a legal block) when alignment fails."""
    if dim < align or dim % align != 0:
        return dim
    b = min(pref, dim)
    b -= b % align
    while dim % b != 0:
        b -= align
    return b


# ---------------------------------------------------------------------------
# Wrapper
# ---------------------------------------------------------------------------
def positional_encoding(x, pe_table, *, block_rows=256, block_cols=2048,
                        force_pallas=False, donate=False):
    """x: (batch, seq, d_model). Returns x + PE[:, :seq] (eval-mode dropout)."""
    B, S, D = x.shape
    max_len, d_model = pe_table.shape
    assert S <= max_len, "sequence length exceeds max_len"
    assert d_model == D

    C = S * D
    # PE row, flattened to match the (B, S*D) lane-dense view of x; pre-cast to
    # x.dtype so the kernel does a single same-dtype add (no in-kernel casts).
    pe_flat = pe_table[:S].reshape(1, C).astype(x.dtype)

    # Tiny inputs: a fused XLA elementwise add beats the custom-call overhead.
    if not force_pallas and x.size * x.dtype.itemsize < (1 << 20):
        return (x.reshape(B, C) + pe_flat).reshape(B, S, D)

    x2d = x.reshape(B, C)
    tb = _pick_block(B, block_rows, 8)      # row tile (multiple of 8 or full B)
    tc = _pick_block(C, block_cols, 128)    # lane tile (multiple of 128 or full C)
    grid = (B // tb, C // tc)

    extra = {}
    if donate:
        # in-place in HBM when x is donated at the jit boundary
        extra["input_output_aliases"] = {0: 0}

    out2d = pl.pallas_call(
        _pe_add_kernel,
        out_shape=jax.ShapeDtypeStruct((B, C), x.dtype),
        grid_spec=pltpu.PrefetchScalarGridSpec(
            num_scalar_prefetch=0,
            grid=grid,
            in_specs=[
                pl.BlockSpec((tb, tc), lambda i, j: (i, j)),   # x tile
                pl.BlockSpec((1, tc), lambda i, j: (0, j)),    # PE row (batch-invariant)
            ],
            out_specs=pl.BlockSpec((tb, tc), lambda i, j: (i, j)),
        ),
        compiler_params=pltpu.CompilerParams(
            dimension_semantics=("parallel", "parallel"),
            vmem_limit_bytes=32 * 1024 * 1024,
        ),
        **extra,
    )(x2d, pe_flat)
    return out2d.reshape(B, S, D)


# ---------------------------------------------------------------------------
# Pure-JAX reference (mirrors the PyTorch forward)
# ---------------------------------------------------------------------------
def _reference_pe_add(x, pe_table):
    S = x.shape[1]
    return (x.astype(jnp.float32) + pe_table[None, :S, :]).astype(x.dtype)


if __name__ == "__main__":
    # config: d_embed=32, max_len=16, dropout_pe (eval-mode identity)
    B, S, D, MAX_LEN = 2, 8, 32, 16
    key = jax.random.PRNGKey(0)
    x = jax.random.normal(key, (B, S, D), dtype=jnp.float32)

    pe_table = build_pe_table(MAX_LEN, D)

    # Small demo shape (force the Pallas path so the kernel is exercised).
    out = positional_encoding(x, pe_table, force_pallas=True)
    out = jax.block_until_ready(out)
    ref = _reference_pe_add(x, pe_table)
    assert out.shape == x.shape and out.dtype == x.dtype
    assert jnp.allclose(out, ref, atol=1e-5, rtol=1e-5), "mismatch vs reference (small)"

    # Slightly larger shape with forced small blocks -> multi-block grid,
    # exercising the tiled / pipelined path and the PE broadcast across tiles.
    B2, S2 = 16, 8
    x2 = jax.random.normal(jax.random.PRNGKey(1), (B2, S2, D), dtype=jnp.float32)
    out2 = positional_encoding(x2, pe_table, block_rows=8, block_cols=128,
                               force_pallas=True)
    out2 = jax.block_until_ready(out2)
    ref2 = _reference_pe_add(x2, pe_table)
    assert jnp.allclose(out2, ref2, atol=1e-5, rtol=1e-5), "mismatch vs reference (tiled)"

    # bf16 path (pre-cast PE, same-dtype add in the kernel).
    x3 = jax.random.normal(jax.random.PRNGKey(2), (B2, S2, D), dtype=jnp.bfloat16)
    out3 = positional_encoding(x3, pe_table, force_pallas=True)
    out3 = jax.block_until_ready(out3)
    ref3 = _reference_pe_add(x3, pe_table)
    assert out3.dtype == jnp.bfloat16
    assert jnp.allclose(out3.astype(jnp.float32), ref3.astype(jnp.float32),
                        atol=2e-2, rtol=2e-2), "mismatch vs reference (bf16)"

    print("KERNEL_OK")
</pallas_src>

<mosaic_0001>
module attributes {stable_mosaic.version = 11 : i64} {
  func.func @_pe_add_kernel(%arg0: i32, %arg1: i32, %arg2: memref<2x256xf32, #tpu.memory_space<vmem>>, %arg3: memref<1x256xf32, #tpu.memory_space<vmem>>, %arg4: memref<2x256xf32, #tpu.memory_space<vmem>>) attributes {dimension_semantics = [#tpu.dimension_semantics<parallel>, #tpu.dimension_semantics<parallel>], iteration_bounds = array<i64: 1, 1>, scalar_prefetch = 0 : i64, scratch_operands = 0 : i64, tpu.core_type = #tpu.core_type<tc>, window_params = [{transform_indices = @transform_0, window_bounds = array<i64: 2, 256>}, {transform_indices = @transform_1, window_bounds = array<i64: 1, 256>}, {transform_indices = @transform_2, window_bounds = array<i64: 2, 256>}]} {
    %c0 = arith.constant 0 : index
    %c0_0 = arith.constant 0 : index
    %0 = vector.load %arg2[%c0, %c0_0] : memref<2x256xf32, #tpu.memory_space<vmem>>, vector<2x256xf32>
    %c0_1 = arith.constant 0 : index
    %c0_2 = arith.constant 0 : index
    %1 = vector.load %arg3[%c0_1, %c0_2] : memref<1x256xf32, #tpu.memory_space<vmem>>, vector<1x256xf32>
    %2 = vector.broadcast %1 : vector<1x256xf32> to vector<2x256xf32>
    %3 = arith.addf %0, %2 : vector<2x256xf32>
    %c0_3 = arith.constant 0 : index
    %c0_4 = arith.constant 0 : index
    %4 = vector.load %arg4[%c0_3, %c0_4] : memref<2x256xf32, #tpu.memory_space<vmem>>, vector<2x256xf32>
    tpu.vector_store %arg4[%c0_3, %c0_4], %3 {strides = array<i32>} : memref<2x256xf32, #tpu.memory_space<vmem>>, vector<2x256xf32>,
    return
  }
  func.func @transform_0(%arg0: i32, %arg1: i32) -> (i32, i32) {
    %c0_i32 = arith.constant 0 : i32
    return %arg0, %arg1 : i32, i32
  }
  func.func @transform_1(%arg0: i32, %arg1: i32) -> (i32, i32) {
    %c0_i32 = arith.constant 0 : i32
    %c0_i32_0 = arith.constant 0 : i32
    return %c0_i32, %arg1 : i32, i32
  }
  func.func @transform_2(%arg0: i32, %arg1: i32) -> (i32, i32) {
    %c0_i32 = arith.constant 0 : i32
    return %arg0, %arg1 : i32, i32
  }
}

</mosaic_0001>

<llo_original>
// kernel: tpu_custom_call.1
$region0: #{tpu_custom_call.1}
  #allocation0 [shape = 'u32[]', space=smem, size = 0x4, offset = 0x4, fixed_abs, tag = 'smem constant byte address 0x4 - core index']
  #allocation1 [shape = 'u32[72,128]{1,0:T(1,128)}', space=vmem, size = 0x9000, scoped, tag = 'internal scratch']
  %s0 = inlined_call_operand.hbm [shape: f32[2,256], index: 0, kind: input, shape index: {}]
  %s1 = inlined_call_operand.hbm [shape: f32[1,256], index: 1, kind: input, shape index: {}]
  %s2 = inlined_call_operand.hbm [shape: f32[2,256], index: 2, kind: output, shape index: {}]
  %s3 = sld [smem:[#allocation0]]
  $region26: #{tpu_custom_call.1} parent=0
    _
  %s5 = ssub.s32 1, %s3
  %s6 = scalar_select 0, %s5, %s3
  $region1: #{tpu_custom_call.1} parent=0
    #allocation2 [shape = 'u8[2048]{0}', space=vmem, size = 0x800, scoped, tag = 'input window, operand 0, single buffered']
    #allocation3 [shape = 's32[1]{0}', space=sflag, size = 0x4, scoped, tag = 'scoped memory for tpu_custom_call.1']
    #allocation4 [shape = 's32[1]{0}', space=sflag, size = 0x4, scoped, tag = 'scoped memory for tpu_custom_call.1']
    #allocation5 [shape = 'u8[1024]{0}', space=vmem, size = 0x400, scoped, tag = 'input window, operand 1, single buffered']
    #allocation6 [shape = 's32[1]{0}', space=sflag, size = 0x4, scoped, tag = 'scoped memory for tpu_custom_call.1']
    #allocation7 [shape = 'u8[2048]{0}', space=vmem, size = 0x800, scoped, tag = 'output window, operand 0, single buffered']
    %7 = vsyncpa [#allocation3], 0
    %8 = vsyncpa [#allocation6], 0
    %9 = vsyncpa [#allocation4], 0
    // Predicated region
    $region2: #{tpu_custom_call.1} parent=1 // pred_check
      _
    $region3: #{tpu_custom_call.1} parent=1 // pred_check_branch
      %11 = sbr.rel (0) target = $region5
    $region4: #{tpu_custom_call.1} parent=1 // pred_region
      %13 = vsyncadd [#allocation3], 0
      %s15 = sshll.u32 %s0, 4
      %s16 = int_to_ptr.hbm [resolvable:$true] %s15
      %s17 = sshll.u32 [#allocation2], 4
      %s18 = int_to_ptr.vmem [resolvable:$true] %s17
      %20 = dma.hbm_to_vmem [thread:$0]  %s16, 64, %s18, [#allocation3]
    $region5: #{tpu_custom_call.1} parent=1 // pred_fallthru
      _
    // Predicated region
    $region6: #{tpu_custom_call.1} parent=1 // pred_check
      _
    $region7: #{tpu_custom_call.1} parent=1 // pred_check_branch
      %22 = sbr.rel (0) target = $region9
    $region8: #{tpu_custom_call.1} parent=1 // pred_region
      %24 = vsyncadd [#allocation6], 0
      %s26 = sshll.u32 %s1, 4
      %s27 = int_to_ptr.hbm [resolvable:$true] %s26
      %s28 = sshll.u32 [#allocation5], 4
      %s29 = int_to_ptr.vmem [resolvable:$true] %s28
      %31 = dma.hbm_to_vmem [thread:$0]  %s27, 32, %s29, [#allocation6]
    $region9: #{tpu_custom_call.1} parent=1 // pred_fallthru
      _
    // Predicated region
    $region10: #{tpu_custom_call.1} parent=1 // pred_check
      _
    $region11: #{tpu_custom_call.1} parent=1 // pred_check_branch
      %33 = sbr.rel (0) target = $region13
    $region12: #{tpu_custom_call.1} parent=1 // pred_region
      %35 = dma.done [#allocation3], 64
    $region13: #{tpu_custom_call.1} parent=1 // pred_fallthru
      _
    // Predicated region
    $region14: #{tpu_custom_call.1} parent=1 // pred_check
      _
    $region15: #{tpu_custom_call.1} parent=1 // pred_check_branch
      %37 = sbr.rel (0) target = $region17
    $region16: #{tpu_custom_call.1} parent=1 // pred_region
      %39 = dma.done [#allocation6], 32
    $region17: #{tpu_custom_call.1} parent=1 // pred_fallthru
      _
    %v40 = vld [vmem:[#allocation2] sm:$0xf]
    %v41 = vld [vmem:[#allocation5] sm:$0x3]
    %v43 = vperm.slane %v41, 0
    %v44 = vperm.slane %v41, 1
    %v45 = vrot.slane %v44, 6
    %vm46 = vcmask 1041408
    %v47 = vsel %vm46, %v43, %v45
    %v49 = vadd.f32 %v40, %v47
    %50 = vst [vmem:[#allocation7] sm:$0xf] %v49
    // Predicated region
    $region18: #{tpu_custom_call.1} parent=1 // pred_check
      _
    $region19: #{tpu_custom_call.1} parent=1 // pred_check_branch
      %52 = sbr.rel (0) target = $region21
    $region20: #{tpu_custom_call.1} parent=1 // pred_region
      %54 = vsyncadd [#allocation4], 0
      %s56 = sshll.u32 [#allocation7], 4
      %s57 = int_to_ptr.vmem [resolvable:$true] %s56
      %s58 = sshll.u32 %s2, 4
      %s59 = int_to_ptr.hbm [resolvable:$true] %s58
      %61 = dma.vmem_to_hbm [thread:$0]  %s57, 64, %s59, [#allocation4]
    $region21: #{tpu_custom_call.1} parent=1 // pred_fallthru
      _
    // Predicated region
    $region22: #{tpu_custom_call.1} parent=1 // pred_check
      _
    $region23: #{tpu_custom_call.1} parent=1 // pred_check_branch
      %63 = sbr.rel (0) target = $region25
    $region24: #{tpu_custom_call.1} parent=1 // pred_region
      %65 = dma.done [#allocation4], 64
    $region25: #{tpu_custom_call.1} parent=1 // pred_fallthru
      _
    %66 = vsyncpa [#allocation3], 1
    %67 = vsyncpa [#allocation6], 1
    %68 = vsyncpa [#allocation4], 1

</llo_original>
